<compile_context>
chip_gen: v5e
topology: v5e:2x2
jax: 0.10.0
libtpu: 0.0.40
codegen_flags: <defaults>
</compile_context>

<pallas_src>
import jax
import jax.numpy as jnp
from jax.experimental import pallas as pl
from jax.experimental.pallas import tpu as pltpu


def _add_bias_kernel(p_ref, x_ref, o_ref):
    # p_ref: (1, F)  lane-dense parameter slab (same block every grid step)
    # x_ref: (TB, F) lane-dense input tile
    # o_ref: (TB, F) output tile
    o_ref[...] = x_ref[...] + p_ref[...]   # (1, F) broadcasts over TB rows


def _round_up(a: int, m: int) -> int:
    return (a + m - 1) // m * m


def model_forward(param: jax.Array, x: jax.Array) -> jax.Array:
    """param: (R, C), x: (B, R, C) -> (B, R, C)  (computes param + x)."""
    B, R, C = x.shape
    assert param.shape == (R, C)
    F = R * C  # 352 for (32, 11)
    itemsize = jnp.dtype(x.dtype).itemsize

    # --- Tiny-batch bypass: launch + one pipeline step (~1-2 us) dwarfs the
    # actual data movement; let XLA fuse the broadcast add.
    if B * F * itemsize < 64 * 1024:
        return param + x

    # Lane-dense 2D views (row-major reshapes, free in the wrapper).
    x2d = x.reshape(B, F)
    p1 = param.reshape(1, F)

    # Regroup G batch rows per slab row so the lane dim is an exact multiple
    # of 128 (G=4: 4*352 = 1408 = 11 full vregs -> unmasked vld/vst, no lane
    # padding).  Fall back to G=1 when B isn't divisible (avoids pad/concat
    # copy passes; only costs the 352->384 tail padding in that case).
    if B % 4 == 0 and (4 * F) % 128 == 0:
        G = 4
    else:
        G = 1
    FG = F * G
    rows = B // G
    xg = x2d.reshape(rows, FG)
    pg = p1 if G == 1 else jnp.tile(p1, (1, G))   # (1, FG), done once

    # Batch-tile sizing: ~6 MiB per input tile -> ~24 MiB for double-buffered
    # in+out, amortizing per-step overhead on all generations.  Budget against
    # the padded lane width so the G=1 (352->384) case is accounted for.
    row_bytes_padded = _round_up(FG, 128) * itemsize
    MAX_TILE_BYTES = 6 << 20
    max_tb = max(8, (MAX_TILE_BYTES // row_bytes_padded) // 8 * 8)

    if rows <= 16:
        TB = rows                      # single block, one pipeline step
    else:
        # >= 2 grid steps so v7x's two TensorCores both get work; rounded to
        # the 8-sublane granularity, capped by the VMEM budget.
        TB = min(max_tb, _round_up(pl.cdiv(rows, 2), 8))
    grid = (pl.cdiv(rows, TB),)
    # Note: a partially out-of-bounds last block is fine for this elementwise
    # add (Pallas pads the read and masks the write).

    cost = pl.CostEstimate(
        flops=B * F,
        transcendentals=0,
        bytes_accessed=2 * B * F * itemsize + F * itemsize,
    )

    outg = pl.pallas_call(
        _add_bias_kernel,
        out_shape=jax.ShapeDtypeStruct((rows, FG), x.dtype),
        grid_spec=pltpu.PrefetchScalarGridSpec(
            num_scalar_prefetch=0,
            grid=grid,
            in_specs=[
                pl.BlockSpec((1, FG), lambda b: (0, 0)),    # parameter, resident
                pl.BlockSpec((TB, FG), lambda b: (b, 0)),   # batch tile of rows
            ],
            out_specs=pl.BlockSpec((TB, FG), lambda b: (b, 0)),
        ),
        compiler_params=pltpu.CompilerParams(
            # Batch axis is independent -> megacore sharding on v7x.
            dimension_semantics=("parallel",),
            # 40 MiB: covers the ~24 MiB of double-buffered tiles on v5e's
            # 16 MiB scoped default, stays under v7x's 64 MiB physical VMEM.
            vmem_limit_bytes=40 << 20,
        ),
        cost_estimate=cost,
    )(pg, xg)

    return outg.reshape(B, R, C)


if __name__ == "__main__":
    key = jax.random.PRNGKey(0)
    k_param, k1, k2, k3 = jax.random.split(key, 4)

    R, C = 32, 11

    # Deterministic "torch.rand(32, 11)" analogue: uniform [0, 1).
    param = jax.random.uniform(k_param, (R, C), dtype=jnp.float32)

    # Case 1: tiny batch -> bypass path (fused XLA add).
    x_small = jax.random.normal(k1, (2, R, C), dtype=jnp.float32)
    out_small = model_forward(param, x_small)

    # Case 2: B % 4 == 0 -> grouped lane-dense (1408-lane) Pallas kernel.
    x_g4 = jax.random.normal(k2, (64, R, C), dtype=jnp.float32)
    out_g4 = model_forward(param, x_g4)

    # Case 3: B % 4 != 0 -> fallback F=352 layout, multi-step grid with a
    # partially out-of-bounds last block (masked write).
    x_g1 = jax.random.normal(k3, (66, R, C), dtype=jnp.float32)
    out_g1 = model_forward(param, x_g1)

    jax.block_until_ready((out_small, out_g4, out_g1))

    # Correctness checks against plain JAX reference (param + x broadcast).
    for x_in, out in ((x_small, out_small), (x_g4, out_g4), (x_g1, out_g1)):
        ref = param + x_in
        assert out.shape == x_in.shape
        assert jnp.allclose(out, ref, atol=1e-6, rtol=1e-6)

    print("KERNEL_OK")
</pallas_src>

<mosaic_0001>
module attributes {stable_mosaic.version = 11 : i64} {
  func.func @_add_bias_kernel(%arg0: i32, %arg1: memref<1x1408xf32, #tpu.memory_space<vmem>>, %arg2: memref<16x1408xf32, #tpu.memory_space<vmem>>, %arg3: memref<16x1408xf32, #tpu.memory_space<vmem>>) attributes {dimension_semantics = [#tpu.dimension_semantics<parallel>], iteration_bounds = array<i64: 1>, scalar_prefetch = 0 : i64, scratch_operands = 0 : i64, tpu.core_type = #tpu.core_type<tc>, window_params = [{pipeline_mode = #tpu.pipeline_mode<synchronous>, transform_indices = @transform_0, window_bounds = array<i64: 1, 1408>}, {transform_indices = @transform_1, window_bounds = array<i64: 16, 1408>}, {transform_indices = @transform_2, window_bounds = array<i64: 16, 1408>}]} {
    %c0 = arith.constant 0 : index
    %c0_0 = arith.constant 0 : index
    %0 = vector.load %arg2[%c0, %c0_0] : memref<16x1408xf32, #tpu.memory_space<vmem>>, vector<16x1408xf32>
    %c0_1 = arith.constant 0 : index
    %c0_2 = arith.constant 0 : index
    %1 = vector.load %arg1[%c0_1, %c0_2] : memref<1x1408xf32, #tpu.memory_space<vmem>>, vector<1x1408xf32>
    %2 = vector.broadcast %1 : vector<1x1408xf32> to vector<16x1408xf32>
    %3 = arith.addf %0, %2 : vector<16x1408xf32>
    %c0_3 = arith.constant 0 : index
    %c0_4 = arith.constant 0 : index
    %4 = vector.load %arg3[%c0_3, %c0_4] : memref<16x1408xf32, #tpu.memory_space<vmem>>, vector<16x1408xf32>
    tpu.vector_store %arg3[%c0_3, %c0_4], %3 {strides = array<i32>} : memref<16x1408xf32, #tpu.memory_space<vmem>>, vector<16x1408xf32>,
    return
  }
  func.func @transform_0(%arg0: i32) -> (i32, i32) {
    %c0_i32 = arith.constant 0 : i32
    %c0_i32_0 = arith.constant 0 : i32
    %c0_i32_1 = arith.constant 0 : i32
    return %c0_i32, %c0_i32_0 : i32, i32
  }
  func.func @transform_1(%arg0: i32) -> (i32, i32) {
    %c0_i32 = arith.constant 0 : i32
    %c0_i32_0 = arith.constant 0 : i32
    return %arg0, %c0_i32 : i32, i32
  }
  func.func @transform_2(%arg0: i32) -> (i32, i32) {
    %c0_i32 = arith.constant 0 : i32
    %c0_i32_0 = arith.constant 0 : i32
    return %arg0, %c0_i32 : i32, i32
  }
}

</mosaic_0001>

<llo_original>
// kernel: tpu_custom_call.1
$region0: #{tpu_custom_call.1}
  #allocation0 [shape = 'u32[]', space=smem, size = 0x4, offset = 0x4, fixed_abs, tag = 'smem constant byte address 0x4 - core index']
  #allocation1 [shape = 'u32[72,128]{1,0:T(1,128)}', space=vmem, size = 0x9000, scoped, tag = 'internal scratch']
  %s0 = inlined_call_operand.hbm [shape: f32[1,1408], index: 0, kind: input, shape index: {}]
  %s1 = inlined_call_operand.hbm [shape: f32[16,1408], index: 1, kind: input, shape index: {}]
  %s2 = inlined_call_operand.hbm [shape: f32[16,1408], index: 2, kind: output, shape index: {}]
  %s3 = sld [smem:[#allocation0]]
  $region26: #{tpu_custom_call.1} parent=0
    _
  %s5 = ssub.s32 1, %s3
  %s6 = scalar_select 0, %s5, %s3
  $region1: #{tpu_custom_call.1} parent=0
    #allocation2 [shape = 'u8[5632]{0}', space=vmem, size = 0x1800, scoped, tag = 'input window, operand 0, single buffered']
    #allocation3 [shape = 's32[1]{0}', space=sflag, size = 0x4, scoped, tag = 'scoped memory for tpu_custom_call.1']
    #allocation4 [shape = 's32[1]{0}', space=sflag, size = 0x4, scoped, tag = 'scoped memory for tpu_custom_call.1']
    #allocation5 [shape = 'u8[90112]{0}', space=vmem, size = 0x16000, scoped, tag = 'input window, operand 1, single buffered']
    #allocation6 [shape = 's32[1]{0}', space=sflag, size = 0x4, scoped, tag = 'scoped memory for tpu_custom_call.1']
    #allocation7 [shape = 'u8[90112]{0}', space=vmem, size = 0x16000, scoped, tag = 'output window, operand 0, single buffered']
    %7 = vsyncpa [#allocation3], 0
    %8 = vsyncpa [#allocation6], 0
    %9 = vsyncpa [#allocation4], 0
    // Predicated region
    $region2: #{tpu_custom_call.1} parent=1 // pred_check
      _
    $region3: #{tpu_custom_call.1} parent=1 // pred_check_branch
      %11 = sbr.rel (0) target = $region5
    $region4: #{tpu_custom_call.1} parent=1 // pred_region
      %13 = vsyncadd [#allocation3], 0
      %s15 = sshll.u32 %s0, 4
      %s16 = int_to_ptr.hbm [resolvable:$true] %s15
      %s17 = sshll.u32 [#allocation2], 4
      %s18 = int_to_ptr.vmem [resolvable:$true] %s17
      %20 = dma.hbm_to_vmem [thread:$0]  %s16, 176, %s18, [#allocation3]
    $region5: #{tpu_custom_call.1} parent=1 // pred_fallthru
      _
    // Predicated region
    $region6: #{tpu_custom_call.1} parent=1 // pred_check
      _
    $region7: #{tpu_custom_call.1} parent=1 // pred_check_branch
      %22 = sbr.rel (0) target = $region9
    $region8: #{tpu_custom_call.1} parent=1 // pred_region
      %24 = vsyncadd [#allocation6], 0
      %s25 = sshll.u32 %s1, 4
      %s26 = int_to_ptr.hbm [resolvable:$true] %s25
      %s27 = sshll.u32 [#allocation5], 4
      %s28 = int_to_ptr.vmem [resolvable:$true] %s27
      %33 = dma.hbm_to_vmem [thread:$0]  %s26, 2816, %s28, [#allocation6], 1408, 1408, 88
    $region9: #{tpu_custom_call.1} parent=1 // pred_fallthru
      _
    // Predicated region
    $region10: #{tpu_custom_call.1} parent=1 // pred_check
      _
    $region11: #{tpu_custom_call.1} parent=1 // pred_check_branch
      %35 = sbr.rel (0) target = $region13
    $region12: #{tpu_custom_call.1} parent=1 // pred_region
      %37 = dma.done [#allocation3], 176
    $region13: #{tpu_custom_call.1} parent=1 // pred_fallthru
      _
    // Predicated region
    $region14: #{tpu_custom_call.1} parent=1 // pred_check
      _
    $region15: #{tpu_custom_call.1} parent=1 // pred_check_branch
      %39 = sbr.rel (0) target = $region17
    $region16: #{tpu_custom_call.1} parent=1 // pred_region
      %41 = dma.done [#allocation6], 2816
    $region17: #{tpu_custom_call.1} parent=1 // pred_fallthru
      _
    %v42 = vld [vmem:[#allocation5] sm:$0xff]
    %v43 = vld [vmem:[#allocation5 + $0x8] sm:$0xff]
    %v44 = vld [vmem:[#allocation5 + $0x10] sm:$0xff]
    %v45 = vld [vmem:[#allocation5 + $0x18] sm:$0xff]
    %v46 = vld [vmem:[#allocation5 + $0x20] sm:$0xff]
    %v47 = vld [vmem:[#allocation5 + $0x28] sm:$0xff]
    %v48 = vld [vmem:[#allocation5 + $0x30] sm:$0xff]
    %v49 = vld [vmem:[#allocation5 + $0x38] sm:$0xff]
    %v50 = vld [vmem:[#allocation5 + $0x40] sm:$0xff]
    %v51 = vld [vmem:[#allocation5 + $0x48] sm:$0xff]
    %v52 = vld [vmem:[#allocation5 + $0x50] sm:$0xff]
    %v53 = vld [vmem:[#allocation5 + $0x58] sm:$0xff]
    %v54 = vld [vmem:[#allocation5 + $0x60] sm:$0xff]
    %v55 = vld [vmem:[#allocation5 + $0x68] sm:$0xff]
    %v56 = vld [vmem:[#allocation5 + $0x70] sm:$0xff]
    %v57 = vld [vmem:[#allocation5 + $0x78] sm:$0xff]
    %v58 = vld [vmem:[#allocation5 + $0x80] sm:$0xff]
    %v59 = vld [vmem:[#allocation5 + $0x88] sm:$0xff]
    %v60 = vld [vmem:[#allocation5 + $0x90] sm:$0xff]
    %v61 = vld [vmem:[#allocation5 + $0x98] sm:$0xff]
    %v62 = vld [vmem:[#allocation5 + $0xa0] sm:$0xff]
    %v63 = vld [vmem:[#allocation5 + $0xa8] sm:$0xff]
    %v64 = vld [vmem:[#allocation2] sm:$0xff]
    %v65 = vld [vmem:[#allocation2 + $0x8] sm:$0x7]
    %v68 = vperm.slane %v64, 0
    %v69 = vperm.slane %v64, 1
    %v70 = vperm.slane %v64, 2
    %v71 = vperm.slane %v64, 3
    %v72 = vperm.slane %v64, 4
    %v73 = vperm.slane %v64, 5
    %v74 = vperm.slane %v64, 6
    %v75 = vperm.slane %v64, 7
    %v76 = vperm.slane %v65, 0
    %v77 = vperm.slane %v65, 1
    %v78 = vperm.slane %v65, 2
    %v90 = vadd.f32 %v42, %v68
    %v91 = vadd.f32 %v43, %v69
    %v92 = vadd.f32 %v44, %v70
    %v93 = vadd.f32 %v45, %v71
    %v94 = vadd.f32 %v46, %v72
    %v95 = vadd.f32 %v47, %v73
    %v96 = vadd.f32 %v48, %v74
    %v97 = vadd.f32 %v49, %v75
    %v98 = vadd.f32 %v50, %v76
    %v99 = vadd.f32 %v51, %v77
    %v100 = vadd.f32 %v52, %v78
    %v101 = vadd.f32 %v53, %v68
    %v102 = vadd.f32 %v54, %v69
    %v103 = vadd.f32 %v55, %v70
    %v104 = vadd.f32 %v56, %v71
    %v105 = vadd.f32 %v57, %v72
    %v106 = vadd.f32 %v58, %v73
    %v107 = vadd.f32 %v59, %v74
    %v108 = vadd.f32 %v60, %v75
    %v109 = vadd.f32 %v61, %v76
    %v110 = vadd.f32 %v62, %v77
    %v111 = vadd.f32 %v63, %v78
    %112 = vst [vmem:[#allocation7] sm:$0xff] %v90
    %113 = vst [vmem:[#allocation7 + $0x8] sm:$0xff] %v91
    %114 = vst [vmem:[#allocation7 + $0x10] sm:$0xff] %v92
    %115 = vst [vmem:[#allocation7 + $0x18] sm:$0xff] %v93
    %116 = vst [vmem:[#allocation7 + $0x20] sm:$0xff] %v94
    %117 = vst [vmem:[#allocation7 + $0x28] sm:$0xff] %v95
    %118 = vst [vmem:[#allocation7 + $0x30] sm:$0xff] %v96
    %119 = vst [vmem:[#allocation7 + $0x38] sm:$0xff] %v97
    %120 = vst [vmem:[#allocation7 + $0x40] sm:$0xff] %v98
    %121 = vst [vmem:[#allocation7 + $0x48] sm:$0xff] %v99
    %122 = vst [vmem:[#allocation7 + $0x50] sm:$0xff] %v100
    %123 = vst [vmem:[#allocation7 + $0x58] sm:$0xff] %v101
    %124 = vst [vmem:[#allocation7 + $0x60] sm:$0xff] %v102
    %125 = vst [vmem:[#allocation7 + $0x68] sm:$0xff] %v103
    %126 = vst [vmem:[#allocation7 + $0x70] sm:$0xff] %v104
    %127 = vst [vmem:[#allocation7 + $0x78] sm:$0xff] %v105
    %128 = vst [vmem:[#allocation7 + $0x80] sm:$0xff] %v106
    %129 = vst [vmem:[#allocation7 + $0x88] sm:$0xff] %v107
    %130 = vst [vmem:[#allocation7 + $0x90] sm:$0xff] %v108
    %131 = vst [vmem:[#allocation7 + $0x98] sm:$0xff] %v109
    %132 = vst [vmem:[#allocation7 + $0xa0] sm:$0xff] %v110
    %133 = vst [vmem:[#allocation7 + $0xa8] sm:$0xff] %v111
    // Predicated region
    $region18: #{tpu_custom_call.1} parent=1 // pred_check
      _
    $region19: #{tpu_custom_call.1} parent=1 // pred_check_branch
      %135 = sbr.rel (0) target = $region21
    $region20: #{tpu_custom_call.1} parent=1 // pred_region
      %137 = vsyncadd [#allocation4], 0
      %s138 = sshll.u32 [#allocation7], 4
      %s139 = int_to_ptr.vmem [resolvable:$true] %s138
      %s140 = sshll.u32 %s2, 4
      %s141 = int_to_ptr.hbm [resolvable:$true] %s140
      %146 = dma.vmem_to_hbm [thread:$0]  %s139, 2816, %s141, [#allocation4], 1408, 1408, 88
    $region21: #{tpu_custom_call.1} parent=1 // pred_fallthru
      _
    // Predicated region
    $region22: #{tpu_custom_call.1} parent=1 // pred_check
      _
    $region23: #{tpu_custom_call.1} parent=1 // pred_check_branch
      %148 = sbr.rel (0) target = $region25
    $region24: #{tpu_custom_call.1} parent=1 // pred_region
      %150 = dma.done [#allocation4], 2816
    $region25: #{tpu_custom_call.1} parent=1 // pred_fallthru
      _
    %151 = vsyncpa [#allocation3], 1
    %152 = vsyncpa [#allocation6], 1
    %153 = vsyncpa [#allocation4], 1

</llo_original>
